<compile_context>
chip_gen: v7x
topology: tpu7x:2x2x1
jax: 0.10.0
libtpu: 0.0.40
codegen_flags: <defaults>
</compile_context>

<pallas_src>
import math
from functools import partial

import jax
import jax.numpy as jnp
import numpy as np
from jax.experimental import pallas as pl
from jax.experimental.pallas import tpu as pltpu


def _round_up(n, m):
    return ((n + m - 1) // m) * m


def _tpu_kind():
    try:
        return jax.devices()[0].device_kind.lower()
    except Exception:
        return ""


def _mce_kernel(x_ref, w_ref, bq_ref, sel_ref, red_ref, bv_ref, o_ref, *,
                num_channels, token_dim, approx_recip):
    """One row-tile of the per-timestep cross-channel attention.

    x_ref  : [tm, C*D]      one (batch, time) position per row, channels contiguous
    w_ref  : [C*D, 3*C*Td]  fused projection  [Q*scale replicated | blockdiag(Wk) | blockdiag(Wv)]
    bq_ref : [1, C*Td]      bq*scale tiled C times (added to the replicated Q)
    sel_ref: [C*Td, C*Td]   0/1 block-diagonal "segment-sum + broadcast" matrix
    red_ref: [C*Td, Td]     0/1 "sum channels into the Td output lanes" matrix
    bv_ref : [1, Td]        bv (added once at the end; softmax weights sum to 1)
    o_ref  : [tm, Td]
    """
    C, Td = num_channels, token_dim
    CTd = C * Td

    # Single fused MXU matmul: replicated Q, all K, all V (f32 accumulation).
    proj = jnp.dot(x_ref[...], w_ref[...], preferred_element_type=jnp.float32)

    q = proj[:, :CTd] + bq_ref[...]          # [tm, C*Td], 128-aligned channel groups
    k = proj[:, CTd:2 * CTd]                 # bk dropped: softmax-invariant shift
    v = proj[:, 2 * CTd:3 * CTd]             # bv deferred to the very end

    # Per-channel score = segment-sum of q*k over each Td-lane group, broadcast
    # back across the group via a tiny MXU matmul (full-vreg VPU/EUP work only).
    s = jnp.dot(q * k, sel_ref[...], preferred_element_type=jnp.float32)   # [tm, C*Td]

    # Plain two-pass softmax over channels (all scores already resident).
    m = jnp.max(s, axis=-1, keepdims=True)                 # max over channels
    e = jnp.exp(s - m)                                     # channel weight, replicated Td times
    denom = jnp.sum(e, axis=-1, keepdims=True) * (1.0 / Td)

    # Weighted channel-sum of V, again via a tiny 0/1 MXU matmul.
    numer = jnp.dot(e * v, red_ref[...], preferred_element_type=jnp.float32)  # [tm, Td]

    inv = pl.reciprocal(denom, approx=approx_recip)
    o_ref[...] = (numer * inv + bv_ref[...]).astype(o_ref.dtype)


def make_fused_operands(params, num_channels, *, compute_dtype=jnp.float32):
    """Build the fused / selector operands once.

    Hoist this out of the hot path if the projection weights are reused across
    calls (avoids re-materializing the block-diagonal weight in HBM per call).
    """
    wq, wk, wv, bq, bk, bv = params
    D, Td = wq.shape
    C = num_channels
    CTd = C * Td
    scale = 1.0 / math.sqrt(float(Td))
    f32 = jnp.float32

    # Fused weight columns: [Q*scale replicated C times | blockdiag(Wk) | blockdiag(Wv)].
    # Note: dense block-diagonal layout is O(C^2) in VMEM/MXU work — fine at
    # these sizes, restructure to a channel-major K/V projection for large C
    # (v7x's 64 MiB VMEM is the first ceiling).
    q_block = jnp.concatenate(
        [jnp.tile(wq.astype(f32) * scale, (1, C)),
         jnp.zeros(((C - 1) * D, CTd), f32)], axis=0)
    k_block = jnp.kron(jnp.eye(C, dtype=f32), wk.astype(f32))
    v_block = jnp.kron(jnp.eye(C, dtype=f32), wv.astype(f32))
    w_fused = jnp.concatenate([q_block, k_block, v_block], axis=1).astype(compute_dtype)

    # bk is intentionally dropped: q.bk is identical for every channel, so it is
    # a softmax-invariant constant shift of the scores.
    bq_rep = jnp.tile(bq.astype(f32) * scale, C).reshape(1, CTd)
    bv_row = bv.astype(f32).reshape(1, Td)

    # 0/1 helper matrices (tiny, VMEM-resident, run on the MXU).
    sel = jnp.kron(jnp.eye(C, dtype=f32), jnp.ones((Td, Td), f32))   # [CTd, CTd]
    red = jnp.tile(jnp.eye(Td, dtype=f32), (C, 1))                   # [CTd, Td]
    return w_fused, bq_rep, sel, red, bv_row


def multi_channels_embedding(x, params, *, tm=2048, use_bf16=None, fused=None):
    """x: [B, T, C, D] float32 -> embeds: [B, T, token_dim]."""
    B, T, C, D = x.shape
    wq = params[0]
    Td = wq.shape[1]

    if C == 1:
        # Faithful to the torch module: a single channel bypasses the attention
        # block entirely (transpose -> squeeze(1)) and returns [B, T, D].
        return x[:, :, 0, :]

    kind = _tpu_kind()
    is_v7 = ("v7" in kind) or ("7x" in kind)
    if use_bf16 is None:
        # bf16-native MXUs on v6e / v7x; keep f32 on older generations.
        use_bf16 = ("v6" in kind) or is_v7
    compute_dtype = jnp.bfloat16 if use_bf16 else jnp.float32

    if fused is None:
        fused = make_fused_operands(params, C, compute_dtype=compute_dtype)
    w_fused, bq_rep, sel, red, bv_row = fused

    CTd = C * Td
    CD = C * D
    N = B * T

    # Lane-dense 2-D view of the input (free reshape; the bf16 cast — when
    # enabled — is the only extra copy and halves the kernel's input DMA).
    x_rows = x.reshape(N, CD).astype(compute_dtype)

    # Row tile: as large as possible to amortize per-grid-step overhead.
    # No jnp.pad of the input: Pallas masks the ragged last block itself.
    tm_eff = min(tm, _round_up(N, 8)) if N >= 8 else N
    steps = -(-N // tm_eff)
    if is_v7 and N > 8 and (steps % 2 == 1):
        # v7x has 2 TensorCores: keep an even number of "parallel" grid steps
        # so megacore sharding does not leave one core idle.
        steps += 1
        tm_eff = max(8, _round_up(-(-N // steps), 8))
        steps = -(-N // tm_eff)
    # (v5e / v6e are single-TC: a forced grid split is pure per-step overhead.)

    kernel = partial(_mce_kernel, num_channels=C, token_dim=Td,
                     approx_recip=bool(use_bf16))

    out = pl.pallas_call(
        kernel,
        out_shape=jax.ShapeDtypeStruct((N, Td), jnp.float32),
        grid_spec=pltpu.PrefetchScalarGridSpec(
            num_scalar_prefetch=0,
            grid=(steps,),
            in_specs=[
                pl.BlockSpec((tm_eff, CD), lambda i: (i, 0)),
                # Constant index_maps -> small operands stay resident in VMEM
                # instead of being re-DMA'd every grid step.
                pl.BlockSpec((CD, 3 * CTd), lambda i: (0, 0)),
                pl.BlockSpec((1, CTd), lambda i: (0, 0)),
                pl.BlockSpec((CTd, CTd), lambda i: (0, 0)),
                pl.BlockSpec((CTd, Td), lambda i: (0, 0)),
                pl.BlockSpec((1, Td), lambda i: (0, 0)),
            ],
            out_specs=pl.BlockSpec((tm_eff, Td), lambda i: (i, 0)),
        ),
        compiler_params=pltpu.CompilerParams(
            dimension_semantics=("parallel",),
            vmem_limit_bytes=64 * 1024 * 1024,
        ),
    )(x_rows, w_fused, bq_rep, sel, red, bv_row)

    return out.reshape(B, T, Td)


def _reference(x, params):
    """Pure-JAX reference mirroring the PyTorch forward (f32 throughout)."""
    B, T, C, D = x.shape
    wq, wk, wv, bq, bk, bv = params
    Td = wq.shape[1]
    q = x[:, :, 0, :] @ wq + bq                    # [B, T, Td]
    k = jnp.einsum("btcd,de->btce", x, wk) + bk    # [B, T, C, Td]
    v = jnp.einsum("btcd,de->btce", x, wv) + bv    # [B, T, C, Td]
    s = jnp.einsum("bte,btce->btc", q, k) / math.sqrt(Td)
    p = jax.nn.softmax(s, axis=-1)
    return jnp.einsum("btc,btce->bte", p, v)       # [B, T, Td]


def _init_params(key, input_size, token_dim):
    ks = jax.random.split(key, 6)
    lim = 1.0 / math.sqrt(input_size)
    wq = jax.random.uniform(ks[0], (input_size, token_dim), jnp.float32, -lim, lim)
    wk = jax.random.uniform(ks[1], (input_size, token_dim), jnp.float32, -lim, lim)
    wv = jax.random.uniform(ks[2], (input_size, token_dim), jnp.float32, -lim, lim)
    bq = jax.random.uniform(ks[3], (token_dim,), jnp.float32, -lim, lim)
    bk = jax.random.uniform(ks[4], (token_dim,), jnp.float32, -lim, lim)
    bv = jax.random.uniform(ks[5], (token_dim,), jnp.float32, -lim, lim)
    return wq, wk, wv, bq, bk, bv


if __name__ == "__main__":
    B, T, C, D = 2, 8, 4, 16     # batch, seq_len, channels, feature dim
    TOKEN_DIM = 32

    key = jax.random.PRNGKey(0)
    kx, kp = jax.random.split(key)
    x = jax.random.normal(kx, (B, T, C, D), dtype=jnp.float32)
    params = _init_params(kp, D, TOKEN_DIM)

    kind = _tpu_kind()
    use_bf16 = ("v6" in kind) or ("v7" in kind) or ("7x" in kind)

    out = multi_channels_embedding(x, params, use_bf16=use_bf16)
    out = jax.block_until_ready(out)

    ref = _reference(x, params)
    assert out.shape == (B, T, TOKEN_DIM)

    # bf16 inputs / approx reciprocal (v6e/v7x) need a looser tolerance than
    # the pure-f32 path.
    tol = 4e-2 if use_bf16 else 1e-4
    np.testing.assert_allclose(np.asarray(out), np.asarray(ref), rtol=tol, atol=tol)

    print("KERNEL_OK")
</pallas_src>

<mosaic_0001>
module attributes {stable_mosaic.version = 11 : i64} {
  func.func @_mce_kernel(%arg0: i32, %arg1: memref<16x64xf32, #tpu.memory_space<vmem>>, %arg2: memref<64x384xf32, #tpu.memory_space<vmem>>, %arg3: memref<1x128xf32, #tpu.memory_space<vmem>>, %arg4: memref<128x128xf32, #tpu.memory_space<vmem>>, %arg5: memref<128x32xf32, #tpu.memory_space<vmem>>, %arg6: memref<1x32xf32, #tpu.memory_space<vmem>>, %arg7: memref<16x32xf32, #tpu.memory_space<vmem>>) attributes {dimension_semantics = [#tpu.dimension_semantics<parallel>], iteration_bounds = array<i64: 1>, scalar_prefetch = 0 : i64, scratch_operands = 0 : i64, tpu.core_type = #tpu.core_type<tc>, window_params = [{transform_indices = @transform_0, window_bounds = array<i64: 16, 64>}, {pipeline_mode = #tpu.pipeline_mode<synchronous>, transform_indices = @transform_1, window_bounds = array<i64: 64, 384>}, {pipeline_mode = #tpu.pipeline_mode<synchronous>, transform_indices = @transform_2, window_bounds = array<i64: 1, 128>}, {pipeline_mode = #tpu.pipeline_mode<synchronous>, transform_indices = @transform_3, window_bounds = array<i64: 128, 128>}, {pipeline_mode = #tpu.pipeline_mode<synchronous>, transform_indices = @transform_4, window_bounds = array<i64: 128, 32>}, {pipeline_mode = #tpu.pipeline_mode<synchronous>, transform_indices = @transform_5, window_bounds = array<i64: 1, 32>}, {transform_indices = @transform_6, window_bounds = array<i64: 16, 32>}]} {
    %c0 = arith.constant 0 : index
    %c0_0 = arith.constant 0 : index
    %0 = vector.load %arg1[%c0, %c0_0] : memref<16x64xf32, #tpu.memory_space<vmem>>, vector<16x64xf32>
    %c0_1 = arith.constant 0 : index
    %c0_2 = arith.constant 0 : index
    %1 = vector.load %arg2[%c0_1, %c0_2] : memref<64x384xf32, #tpu.memory_space<vmem>>, vector<64x384xf32>
    %cst = arith.constant dense<0.000000e+00> : vector<16x384xf32>
    %2 = tpu.matmul %0, %1, %cst {dimension_numbers = #tpu.dot_dimension_numbers<[1], [0], [0], [1], [0, 0, 1, 1], [], []>} : vector<16x64xf32>, vector<64x384xf32>, vector<16x384xf32> -> vector<16x384xf32>
    %3 = vector.extract_strided_slice %2 {offsets = [0, 0], sizes = [16, 128], strides = [1, 1]} : vector<16x384xf32> to vector<16x128xf32>
    %c0_3 = arith.constant 0 : index
    %c0_4 = arith.constant 0 : index
    %4 = vector.load %arg3[%c0_3, %c0_4] : memref<1x128xf32, #tpu.memory_space<vmem>>, vector<1x128xf32>
    %5 = vector.broadcast %4 : vector<1x128xf32> to vector<16x128xf32>
    %6 = arith.addf %3, %5 : vector<16x128xf32>
    %7 = vector.extract_strided_slice %2 {offsets = [0, 128], sizes = [16, 128], strides = [1, 1]} : vector<16x384xf32> to vector<16x128xf32>
    %8 = vector.extract_strided_slice %2 {offsets = [0, 256], sizes = [16, 128], strides = [1, 1]} : vector<16x384xf32> to vector<16x128xf32>
    %9 = arith.mulf %6, %7 : vector<16x128xf32>
    %c0_5 = arith.constant 0 : index
    %c0_6 = arith.constant 0 : index
    %10 = vector.load %arg4[%c0_5, %c0_6] : memref<128x128xf32, #tpu.memory_space<vmem>>, vector<128x128xf32>
    %cst_7 = arith.constant dense<0.000000e+00> : vector<16x128xf32>
    %11 = tpu.matmul %9, %10, %cst_7 {dimension_numbers = #tpu.dot_dimension_numbers<[1], [0], [0], [1], [0, 0, 1, 1], [], []>} : vector<16x128xf32>, vector<128x128xf32>, vector<16x128xf32> -> vector<16x128xf32>
    %cst_8 = arith.constant dense<0xFF800000> : vector<16xf32>
    %12 = vector.multi_reduction <maximumf>, %11, %cst_8 [1] : vector<16x128xf32> to vector<16xf32>
    %13 = vector.shape_cast %12 : vector<16xf32> to vector<16x1xf32>
    %14 = vector.broadcast %13 : vector<16x1xf32> to vector<16x128xf32>
    %15 = arith.subf %11, %14 : vector<16x128xf32>
    %16 = math.exp %15 : vector<16x128xf32>
    %cst_9 = arith.constant dense<0.000000e+00> : vector<16xf32>
    %17 = vector.multi_reduction <add>, %16, %cst_9 [1] : vector<16x128xf32> to vector<16xf32>
    %18 = vector.shape_cast %17 : vector<16xf32> to vector<16x1xf32>
    %cst_10 = arith.constant 3.125000e-02 : f32
    %19 = vector.broadcast %cst_10 : f32 to vector<16x1xf32>
    %20 = arith.mulf %18, %19 : vector<16x1xf32>
    %21 = arith.mulf %16, %8 : vector<16x128xf32>
    %c0_11 = arith.constant 0 : index
    %c0_12 = arith.constant 0 : index
    %22 = vector.load %arg5[%c0_11, %c0_12] : memref<128x32xf32, #tpu.memory_space<vmem>>, vector<128x32xf32>
    %cst_13 = arith.constant dense<0.000000e+00> : vector<16x32xf32>
    %23 = tpu.matmul %21, %22, %cst_13 {dimension_numbers = #tpu.dot_dimension_numbers<[1], [0], [0], [1], [0, 0, 1, 1], [], []>} : vector<16x128xf32>, vector<128x32xf32>, vector<16x32xf32> -> vector<16x32xf32>
    %24 = tpu.reciprocal %20 : vector<16x1xf32> -> vector<16x1xf32>
    %25 = vector.broadcast %24 : vector<16x1xf32> to vector<16x32xf32>
    %26 = arith.mulf %23, %25 : vector<16x32xf32>
    %c0_14 = arith.constant 0 : index
    %c0_15 = arith.constant 0 : index
    %27 = vector.load %arg6[%c0_14, %c0_15] : memref<1x32xf32, #tpu.memory_space<vmem>>, vector<1x32xf32>
    %28 = vector.broadcast %27 : vector<1x32xf32> to vector<16x32xf32>
    %29 = arith.addf %26, %28 : vector<16x32xf32>
    %c0_16 = arith.constant 0 : index
    %c0_17 = arith.constant 0 : index
    %30 = vector.load %arg7[%c0_16, %c0_17] : memref<16x32xf32, #tpu.memory_space<vmem>>, vector<16x32xf32>
    tpu.vector_store %arg7[%c0_16, %c0_17], %29 {strides = array<i32>} : memref<16x32xf32, #tpu.memory_space<vmem>>, vector<16x32xf32>,
    return
  }
  func.func @transform_0(%arg0: i32) -> (i32, i32) {
    %c0_i32 = arith.constant 0 : i32
    %c0_i32_0 = arith.constant 0 : i32
    return %arg0, %c0_i32 : i32, i32
  }
  func.func @transform_1(%arg0: i32) -> (i32, i32) {
    %c0_i32 = arith.constant 0 : i32
    %c0_i32_0 = arith.constant 0 : i32
    %c0_i32_1 = arith.constant 0 : i32
    return %c0_i32, %c0_i32_0 : i32, i32
  }
  func.func @transform_2(%arg0: i32) -> (i32, i32) {
    %c0_i32 = arith.constant 0 : i32
    %c0_i32_0 = arith.constant 0 : i32
    %c0_i32_1 = arith.constant 0 : i32
    return %c0_i32, %c0_i32_0 : i32, i32
  }
  func.func @transform_3(%arg0: i32) -> (i32, i32) {
    %c0_i32 = arith.constant 0 : i32
    %c0_i32_0 = arith.constant 0 : i32
    %c0_i32_1 = arith.constant 0 : i32
    return %c0_i32, %c0_i32_0 : i32, i32
  }
  func.func @transform_4(%arg0: i32) -> (i32, i32) {
    %c0_i32 = arith.constant 0 : i32
    %c0_i32_0 = arith.constant 0 : i32
    %c0_i32_1 = arith.constant 0 : i32
    return %c0_i32, %c0_i32_0 : i32, i32
  }
  func.func @transform_5(%arg0: i32) -> (i32, i32) {
    %c0_i32 = arith.constant 0 : i32
    %c0_i32_0 = arith.constant 0 : i32
    %c0_i32_1 = arith.constant 0 : i32
    return %c0_i32, %c0_i32_0 : i32, i32
  }
  func.func @transform_6(%arg0: i32) -> (i32, i32) {
    %c0_i32 = arith.constant 0 : i32
    %c0_i32_0 = arith.constant 0 : i32
    return %arg0, %c0_i32 : i32, i32
  }
}

</mosaic_0001>

<llo_original>
// kernel: tpu_custom_call.1
$region0: #{tpu_custom_call.1}
  #allocation0 [shape = 'u32[]', space=smem, size = 0x4, offset = 0x4, fixed_abs, tag = 'smem constant byte address 0x4 - core index']
  #allocation1 [shape = 'u32[144,128]{1,0:T(1,128)}', space=vmem, size = 0x12000, scoped, tag = 'internal scratch']
  %s0 = inlined_call_operand.hbm [shape: f32[16,64], index: 0, kind: input, shape index: {}]
  %s1 = inlined_call_operand.hbm [shape: f32[64,384], index: 1, kind: input, shape index: {}]
  %s2 = inlined_call_operand.hbm [shape: f32[1,128], index: 2, kind: input, shape index: {}]
  %s3 = inlined_call_operand.hbm [shape: f32[128,128], index: 3, kind: input, shape index: {}]
  %s4 = inlined_call_operand.hbm [shape: f32[128,32], index: 4, kind: input, shape index: {}]
  %s5 = inlined_call_operand.hbm [shape: f32[1,32], index: 5, kind: input, shape index: {}]
  %s6 = inlined_call_operand.hbm [shape: f32[16,32], index: 6, kind: output, shape index: {}]
  %s7 = sld [smem:[#allocation0]]
  $region58: #{tpu_custom_call.1} parent=0
    _
  %s9 = ssub.s32 1, %s7
  %s10 = scalar_select 0, %s9, %s7
  $region1: #{tpu_custom_call.1} parent=0
    #allocation2 [shape = 'u8[8192]{0}', space=vmem, size = 0x2000, scoped, tag = 'input window, operand 0, single buffered']
    #allocation3 [shape = 's32[1]{0}', space=sflag, size = 0x4, scoped, tag = 'scoped memory for tpu_custom_call.1']
    #allocation4 [shape = 's32[1]{0}', space=sflag, size = 0x4, scoped, tag = 'scoped memory for tpu_custom_call.1']
    #allocation5 [shape = 'u8[98304]{0}', space=vmem, size = 0x18000, scoped, tag = 'input window, operand 1, single buffered']
    #allocation6 [shape = 's32[1]{0}', space=sflag, size = 0x4, scoped, tag = 'scoped memory for tpu_custom_call.1']
    #allocation7 [shape = 'u8[512]{0}', space=vmem, size = 0x400, scoped, tag = 'input window, operand 2, single buffered']
    #allocation8 [shape = 'u8[65536]{0}', space=vmem, size = 0x10000, scoped, tag = 'input window, operand 3, single buffered']
    #allocation9 [shape = 's32[1]{0}', space=sflag, size = 0x4, scoped, tag = 'scoped memory for tpu_custom_call.1']
    #allocation10 [shape = 'u8[65536]{0}', space=vmem, size = 0x10000, scoped, tag = 'input window, operand 4, single buffered']
    #allocation11 [shape = 'u8[512]{0}', space=vmem, size = 0x400, scoped, tag = 'input window, operand 5, single buffered']
    #allocation12 [shape = 's32[1]{0}', space=sflag, size = 0x4, scoped, tag = 'scoped memory for tpu_custom_call.1']
    #allocation13 [shape = 'u8[8192]{0}', space=vmem, size = 0x2000, scoped, tag = 'output window, operand 0, single buffered']
    %11 = vsyncpa [#allocation3], 0
    %12 = vsyncpa [#allocation6], 0
    %13 = vsyncpa [#allocation9], 0
    %14 = vsyncpa [#allocation12], 0
    %15 = vsyncpa [#allocation4], 0
    // Predicated region
    $region2: #{tpu_custom_call.1} parent=1 // pred_check
      _
    $region3: #{tpu_custom_call.1} parent=1 // pred_check_branch
      %17 = sbr.rel (0) target = $region5
    $region4: #{tpu_custom_call.1} parent=1 // pred_region
      %s19 = ssub.s32 256, 256
      %20 = vsyncadd [#allocation3], %s19
      %s21 = sshll.u32 [#allocation2], 4
      %s22 = int_to_ptr.vmem [resolvable:$true] %s21
      %27 = dma.hbm_to_vmem [thread:$0]  %s0, 256, %s22, [#allocation3], 128, 128, 8
    $region5: #{tpu_custom_call.1} parent=1 // pred_fallthru
      _
    // Predicated region
    $region6: #{tpu_custom_call.1} parent=1 // pred_check
      _
    $region7: #{tpu_custom_call.1} parent=1 // pred_check_branch
      %29 = sbr.rel (0) target = $region9
    $region8: #{tpu_custom_call.1} parent=1 // pred_region
      %s31 = ssub.s32 3072, 3072
      %32 = vsyncadd [#allocation6], %s31
      %s33 = sshll.u32 [#allocation5], 4
      %s34 = int_to_ptr.vmem [resolvable:$true] %s33
      %39 = dma.hbm_to_vmem [thread:$0]  %s1, 3072, %s34, [#allocation6], 384, 384, 24
    $region9: #{tpu_custom_call.1} parent=1 // pred_fallthru
      _
    // Predicated region
    $region10: #{tpu_custom_call.1} parent=1 // pred_check
      _
    $region11: #{tpu_custom_call.1} parent=1 // pred_check_branch
      %41 = sbr.rel (0) target = $region13
    $region12: #{tpu_custom_call.1} parent=1 // pred_region
      %s43 = ssub.s32 16, 16
      %44 = vsyncadd [#allocation6], %s43
      %s46 = sshll.u32 [#allocation7], 4
      %s47 = int_to_ptr.vmem [resolvable:$true] %s46
      %49 = dma.hbm_to_vmem [thread:$0]  %s2, 16, %s47, [#allocation6]
    $region13: #{tpu_custom_call.1} parent=1 // pred_fallthru
      _
    // Predicated region
    $region14: #{tpu_custom_call.1} parent=1 // pred_check
      _
    $region15: #{tpu_custom_call.1} parent=1 // pred_check_branch
      %51 = sbr.rel (0) target = $region17
    $region16: #{tpu_custom_call.1} parent=1 // pred_region
      %s53 = ssub.s32 2048, 2048
      %54 = vsyncadd [#allocation9], %s53
      %s55 = sshll.u32 [#allocation8], 4
      %s56 = int_to_ptr.vmem [resolvable:$true] %s55
      %61 = dma.hbm_to_vmem [thread:$0]  %s3, 2048, %s56, [#allocation9], 128, 128, 8
    $region17: #{tpu_custom_call.1} parent=1 // pred_fallthru
      _
    // Predicated region
    $region18: #{tpu_custom_call.1} parent=1 // pred_check
      _
    $region19: #{tpu_custom_call.1} parent=1 // pred_check_branch
      %63 = sbr.rel (0) target = $region21
    $region20: #{tpu_custom_call.1} parent=1 // pred_region
      %s65 = ssub.s32 2048, 2048
      %66 = vsyncadd [#allocation9], %s65
      %s67 = sshll.u32 [#allocation10], 4
      %s68 = int_to_ptr.vmem [resolvable:$true] %s67
      %73 = dma.hbm_to_vmem [thread:$0]  %s4, 2048, %s68, [#allocation9], 128, 128, 8
    $region21: #{tpu_custom_call.1} parent=1 // pred_fallthru
      _
    // Predicated region
    $region22: #{tpu_custom_call.1} parent=1 // pred_check
      _
    $region23: #{tpu_custom_call.1} parent=1 // pred_check_branch
      %75 = sbr.rel (0) target = $region25
    $region24: #{tpu_custom_call.1} parent=1 // pred_region
      %s77 = ssub.s32 16, 16
      %78 = vsyncadd [#allocation12], %s77
      %s80 = sshll.u32 [#allocation11], 4
      %s81 = int_to_ptr.vmem [resolvable:$true] %s80
      %83 = dma.hbm_to_vmem [thread:$0]  %s5, 16, %s81, [#allocation12]
    $region25: #{tpu_custom_call.1} parent=1 // pred_fallthru
      _
    // Predicated region
    $region26: #{tpu_custom_call.1} parent=1 // pred_check
      _
    $region27: #{tpu_custom_call.1} parent=1 // pred_check_branch
      %85 = sbr.rel (0) target = $region29
    $region28: #{tpu_custom_call.1} parent=1 // pred_region
      %86 = dma.done [#allocation3], 256
    $region29: #{tpu_custom_call.1} parent=1 // pred_fallthru
      _
    // Predicated region
    $region30: #{tpu_custom_call.1} parent=1 // pred_check
      _
    $region31: #{tpu_custom_call.1} parent=1 // pred_check_branch
      %88 = sbr.rel (0) target = $region33
    $region32: #{tpu_custom_call.1} parent=1 // pred_region
      %89 = dma.done [#allocation6], 3072
    $region33: #{tpu_custom_call.1} parent=1 // pred_fallthru
      _
    // Predicated region
    $region34: #{tpu_custom_call.1} parent=1 // pred_check
      _
    $region35: #{tpu_custom_call.1} parent=1 // pred_check_branch
      %91 = sbr.rel (0) target = $region37
    $region36: #{tpu_custom_call.1} parent=1 // pred_region
      %92 = dma.done [#allocation6], 16
    $region37: #{tpu_custom_call.1} parent=1 // pred_fallthru
      _
    // Predicated region
    $region38: #{tpu_custom_call.1} parent=1 // pred_check
      _
    $region39: #{tpu_custom_call.1} parent=1 // pred_check_branch
      %94 = sbr.rel (0) target = $region41
    $region40: #{tpu_custom_call.1} parent=1 // pred_region
      %95 = dma.done [#allocation9], 2048
    $region41: #{tpu_custom_call.1} parent=1 // pred_fallthru
      _
    // Predicated region
    $region42: #{tpu_custom_call.1} parent=1 // pred_check
      _
    $region43: #{tpu_custom_call.1} parent=1 // pred_check_branch
      %97 = sbr.rel (0) target = $region45
    $region44: #{tpu_custom_call.1} parent=1 // pred_region
      %98 = dma.done [#allocation9], 2048
    $region45: #{tpu_custom_call.1} parent=1 // pred_fallthru
      _
    // Predicated region
    $region46: #{tpu_custom_call.1} parent=1 // pred_check
      _
    $region47: #{tpu_custom_call.1} parent=1 // pred_check_branch
      %100 = sbr.rel (0) target = $region49
    $region48: #{tpu_custom_call.1} parent=1 // pred_region
      %101 = dma.done [#allocation12], 16
    $region49: #{tpu_custom_call.1} parent=1 // pred_fallthru
      _
    %v102 = vld [vmem:[#allocation2] sm:$0xff]
    %v103 = vld [vmem:[#allocation2 + $0x8] sm:$0xff]
    %v104 = vld [vmem:[#allocation5] sm:$0xff]
    %v105 = vld [vmem:[#allocation5 + $0x8] sm:$0xff]
    %v106 = vld [vmem:[#allocation5 + $0x10] sm:$0xff]
    %v107 = vld [vmem:[#allocation5 + $0x18] sm:$0xff]
    %v108 = vld [vmem:[#allocation5 + $0x20] sm:$0xff]
    %v109 = vld [vmem:[#allocation5 + $0x28] sm:$0xff]
    %v110 = vld [vmem:[#allocation5 + $0x30] sm:$0xff]
    %v111 = vld [vmem:[#allocation5 + $0x38] sm:$0xff]
    %v112 = vld [vmem:[#allocation5 + $0x40] sm:$0xff]
    %v113 = vld [vmem:[#allocation5 + $0x48] sm:$0xff]
    %v114 = vld [vmem:[#allocation5 + $0x50] sm:$0xff]
    %v115 = vld [vmem:[#allocation5 + $0x58] sm:$0xff]
    %v116 = vld [vmem:[#allocation5 + $0x60] sm:$0xff]
    %v117 = vld [vmem:[#allocation5 + $0x68] sm:$0xff]
    %v118 = vld [vmem:[#allocation5 + $0x70] sm:$0xff]
    %v119 = vld [vmem:[#allocation5 + $0x78] sm:$0xff]
    %v120 = vld [vmem:[#allocation5 + $0x80] sm:$0xff]
    %v121 = vld [vmem:[#allocation5 + $0x88] sm:$0xff]
    %v122 = vld [vmem:[#allocation5 + $0x90] sm:$0xff]
    %v123 = vld [vmem:[#allocation5 + $0x98] sm:$0xff]
    %v124 = vld [vmem:[#allocation5 + $0xa0] sm:$0xff]
    %v125 = vld [vmem:[#allocation5 + $0xa8] sm:$0xff]
    %v126 = vld [vmem:[#allocation5 + $0xb0] sm:$0xff]
    %v127 = vld [vmem:[#allocation5 + $0xb8] sm:$0xff]
    %vm128 = vcmask 523264
    %v130 = vsel %vm128, %v102, 0
    %v133 = vsel %vm128, %v103, 0
    %135 = vmatprep.subr.mxu0 %v105
    %136 = vmatpush1.msra.mxu0 %v104
    %137 = vmatprep.subr.mxu0 %v108
    %138 = vmatpush1.msra.mxu0 %v107
    %139 = vmatprep.subr.mxu0 %v111
    %140 = vmatpush1.msra.mxu0 %v110
    %141 = vmatprep.subr.mxu0 %v114
    %142 = vmatpush1.msra.mxu0 %v113
    %143 = vmatprep.subr.mxu0 %v117
    %144 = vmatpush1.msra.mxu0 %v116
    %145 = vmatprep.subr.mxu0 %v120
    %146 = vmatpush1.msra.mxu0 %v119
    %147 = vmatprep.subr.mxu0 %v123
    %148 = vmatpush1.msra.mxu0 %v122
    %149 = vmatprep.subr.mxu0 %v126
    %150 = vmatpush1.msra.mxu0 %v125
    %151 = vmatprep.subr.mxu0 0.0
    %152 = vmatpush1.msra.mxu0 0.0
    %153 = vmatprep.subr.mxu0 0.0
    %154 = vmatpush1.msra.mxu0 0.0
    %155 = vmatprep.subr.mxu0 0.0
    %156 = vmatpush1.msra.mxu0 0.0
    %157 = vmatprep.subr.mxu0 0.0
    %158 = vmatpush1.msra.mxu0 0.0
    %159 = vmatprep.subr.mxu0 0.0
    %160 = vmatpush1.msra.mxu0 0.0
    %161 = vmatprep.subr.mxu0 0.0
    %162 = vmatpush1.msra.mxu0 0.0
    %163 = vmatprep.subr.mxu0 0.0
    %164 = vmatpush1.msra.mxu0 0.0
    %165 = vmatprep.subr.mxu0 0.0
    %166 = vmatpush1.msra.mxu0 0.0
    %167 = vmatprep.subr.mxu0 0.0
    %168 = vmatpush1.msra.mxu0 0.0
    %169 = vmatprep.subr.mxu0 0.0
    %170 = vmatpush1.msra.mxu0 0.0
    %171 = vmatprep.subr.mxu0 0.0
    %172 = vmatpush1.msra.mxu0 0.0
    %173 = vmatprep.subr.mxu0 0.0
    %174 = vmatpush1.msra.mxu0 0.0
    %175 = vmatprep.subr.mxu0 0.0
    %176 = vmatpush1.msra.mxu0 0.0
    %177 = vmatprep.subr.mxu0 0.0
    %178 = vmatpush1.msra.mxu0 0.0
    %179 = vmatprep.subr.mxu0 0.0
    %180 = vmatpush1.msra.mxu0 0.0
    %181 = vmatprep.subr.mxu0 0.0
    %182 = vmatpush1.msra.mxu0 0.0
    %183 = vmatprep.subr.mxu0 0.0
    %184 = vmatpush1.msra.mxu0 0.0
    %185 = vmatprep.subr.mxu0 0.0
    %186 = vmatpush1.msra.mxu0 0.0
    %187 = vmatprep.subr.mxu0 0.0
    %188 = vmatpush1.msra.mxu0 0.0
    %189 = vmatprep.subr.mxu0 0.0
    %190 = vmatpush1.msra.mxu0 0.0
    %191 = vmatprep.subr.mxu0 0.0
    %192 = vmatpush1.msra.mxu0 0.0
    %193 = vmatprep.subr.mxu0 0.0
    %194 = vmatpush1.msra.mxu0 0.0
    %195 = vmatprep.subr.mxu0 0.0
    %196 = vmatpush1.msra.mxu0 0.0
    %197 = vmatprep.subr.mxu0 0.0
    %198 = vmatpush1.msra.mxu0 0.0
    %199 = vmatprep.mubr.f32.mxu0 0.0
    %200 = vmatmul.mubr.f32.gmra.mrb[0].mxu0 %v130
    %v201 = vpop.f32.mrb[0].mxu0
    %v202 = vadd.f32 0.0, %v201
    %v203 = vpop.f32.mrb[0].mxu0
    %v204 = vadd.f32 0.0, %v203
    %205 = vmatprep.mubr.f32.mxu0 0.0
    %206 = vmatmul.mubr.f32.gmra.mrb[0].mxu0 %v133
    %v207 = vpop.f32.mrb[0].mxu0
    %v208 = vadd.f32 0.0, %v207
    %v209 = vpop.f32.mrb[0].mxu0
    %v210 = vadd.f32 0.0, %v209
    %211 = vdwg.mxu0
    %212 = vmatprep.subr.mxu0 0.0
    %213 = vmatpush1.msra.mxu0 %v106
    %214 = vmatprep.subr.mxu0 0.0
    %215 = vmatpush1.msra.mxu0 %v109
    %216 = vmatprep.subr.mxu0 0.0
    %217 = vmatpush1.msra.mxu0 %v112
    %218 = vmatprep.subr.mxu0 0.0
    %219 = vmatpush1.msra.mxu0 %v115
    %220 = vmatprep.subr.mxu0 0.0
    %221 = vmatpush1.msra.mxu0 %v118
    %222 = vmatprep.subr.mxu0 0.0
    %223 = vmatpush1.msra.mxu0 %v121
    %224 = vmatprep.subr.mxu0 0.0
    %225 = vmatpush1.msra.mxu0 %v124
    %226 = vmatprep.subr.mxu0 0.0
    %227 = vmatpush1.msra.mxu0 %v127
    %228 = vmatprep.subr.mxu0 0.0
    %229 = vmatpush1.msra.mxu0 0.0
    %230 = vmatprep.subr.mxu0 0.0
    %231 = vmatpush1.msra.mxu0 0.0
    %232 = vmatprep.subr.mxu0 0.0
    %233 = vmatpush1.msra.mxu0 0.0
    %234 = vmatprep.subr.mxu0 0.0
    %235 = vmatpush1.msra.mxu0 0.0
    %236 = vmatprep.subr.mxu0 0.0
    %237 = vmatpush1.msra.mxu0 0.0
    %238 = vmatprep.subr.mxu0 0.0
    %239 = vmatpush1.msra.mxu0 0.0
    %240 = vmatprep.subr.mxu0 0.0
    %241 = vmatpush1.msra.mxu0 0.0
    %242 = vmatprep.subr.mxu0 0.0
    %243 = vmatpush1.msra.mxu0 0.0
    %244 = vmatprep.subr.mxu0 0.0
    %245 = vmatpush1.msra.mxu0 0.0
    %246 = vmatprep.subr.mxu0 0.0
    %247 = vmatpush1.msra.mxu0 0.0
    %248 = vmatprep.subr.mxu0 0.0
    %249 = vmatpush1.msra.mxu0 0.0
    %250 = vmatprep.subr.mxu0 0.0
    %251 = vmatpush1.msra.mxu0 0.0
    %252 = vmatprep.subr.mxu0 0.0
    %253 = vmatpush1.msra.mxu0 0.0
    %254 = vmatprep.subr.mxu0 0.0
    %255 = vmatpush1.msra.mxu0 0.0
    %256 = vmatprep.subr.mxu0 0.0
    %257 = vmatpush1.msra.mxu0 0.0
    %258 = vmatprep.subr.mxu0 0.0
    %259 = vmatpush1.msra.mxu0 0.0
    %260 = vmatprep.subr.mxu0 0.0
    %261 = vmatpush1.msra.mxu0 0.0
    %262 = vmatprep.subr.mxu0 0.0
    %263 = vmatpush1.msra.mxu0 0.0
    %264 = vmatprep.subr.mxu0 0.0
    %265 = vmatpush1.msra.mxu0 0.0
    %266 = vmatprep.subr.mxu0 0.0
    %267 = vmatpush1.msra.mxu0 0.0
    %268 = vmatprep.subr.mxu0 0.0
    %269 = vmatpush1.msra.mxu0 0.0
    %270 = vmatprep.subr.mxu0 0.0
    %271 = vmatpush1.msra.mxu0 0.0
    %272 = vmatprep.subr.mxu0 0.0
    %273 = vmatpush1.msra.mxu0 0.0
    %274 = vmatprep.subr.mxu0 0.0
    %275 = vmatpush1.msra.mxu0 0.0
    %276 = vmatprep.mubr.f32.mxu0 0.0
    %277 = vmatmul.mubr.f32.gmra.mrb[0].mxu0 %v130
    %v278 = vpop.f32.mrb[0].mxu0
    %v279 = vadd.f32 0.0, %v278
    %v280 = vpop.f32.mrb[0].mxu0
    %281 = vmatprep.mubr.f32.mxu0 0.0
    %282 = vmatmul.mubr.f32.gmra.mrb[0].mxu0 %v133
    %v283 = vpop.f32.mrb[0].mxu0
    %v284 = vadd.f32 0.0, %v283
    %v285 = vpop.f32.mrb[0].mxu0
    %286 = vdwg.mxu0
    %v287 = vld [vmem:[#allocation7] sm:$0x1]
    %v289 = vlaneseq
    %v290 = vshrl.u32 %v289, 7
    %v291 = vsub.s32 0, %v290
    %v292 = vrot.slane %v287, %v291
    %v294 = vadd.f32 %v202, %v292
    %v295 = vadd.f32 %v208, %v292
    %v296 = vmul.f32 %v294, %v204
    %v297 = vmul.f32 %v295, %v210
    %v298 = vld [vmem:[#allocation8] sm:$0xff]
    %v299 = vld [vmem:[#allocation8 + $0x8] sm:$0xff]
    %v300 = vld [vmem:[#allocation8 + $0x10] sm:$0xff]
    %v301 = vld [vmem:[#allocation8 + $0x18] sm:$0xff]
    %v302 = vld [vmem:[#allocation8 + $0x20] sm:$0xff]
    %v303 = vld [vmem:[#allocation8 + $0x28] sm:$0xff]
    %v304 = vld [vmem:[#allocation8 + $0x30] sm:$0xff]
    %v305 = vld [vmem:[#allocation8 + $0x38] sm:$0xff]
    %v306 = vld [vmem:[#allocation8 + $0x40] sm:$0xff]
    %v307 = vld [vmem:[#allocation8 + $0x48] sm:$0xff]
    %v308 = vld [vmem:[#allocation8 + $0x50] sm:$0xff]
    %v309 = vld [vmem:[#allocation8 + $0x58] sm:$0xff]
    %v310 = vld [vmem:[#allocation8 + $0x60] sm:$0xff]
    %v311 = vld [vmem:[#allocation8 + $0x68] sm:$0xff]
    %v312 = vld [vmem:[#allocation8 + $0x70] sm:$0xff]
    %v313 = vld [vmem:[#allocation8 + $0x78] sm:$0xff]
    %314 = vmatprep.subr.mxu0 0.0
    %315 = vmatpush1.msra.mxu0 %v298
    %316 = vmatprep.subr.mxu0 0.0
    %317 = vmatpush1.msra.mxu0 %v299
    %318 = vmatprep.subr.mxu0 0.0
    %319 = vmatpush1.msra.mxu0 %v300
    %320 = vmatprep.subr.mxu0 0.0
    %321 = vmatpush1.msra.mxu0 %v301
    %322 = vmatprep.subr.mxu0 0.0
    %323 = vmatpush1.msra.mxu0 %v302
    %324 = vmatprep.subr.mxu0 0.0
    %325 = vmatpush1.msra.mxu0 %v303
    %326 = vmatprep.subr.mxu0 0.0
    %327 = vmatpush1.msra.mxu0 %v304
    %328 = vmatprep.subr.mxu0 0.0
    %329 = vmatpush1.msra.mxu0 %v305
    %330 = vmatprep.subr.mxu0 0.0
    %331 = vmatpush1.msra.mxu0 %v306
    %332 = vmatprep.subr.mxu0 0.0
    %333 = vmatpush1.msra.mxu0 %v307
    %334 = vmatprep.subr.mxu0 0.0
    %335 = vmatpush1.msra.mxu0 %v308
    %336 = vmatprep.subr.mxu0 0.0
    %337 = vmatpush1.msra.mxu0 %v309
    %338 = vmatprep.subr.mxu0 0.0
    %339 = vmatpush1.msra.mxu0 %v310
    %340 = vmatprep.subr.mxu0 0.0
    %341 = vmatpush1.msra.mxu0 %v311
    %342 = vmatprep.subr.mxu0 0.0
    %343 = vmatpush1.msra.mxu0 %v312
    %344 = vmatprep.subr.mxu0 0.0
    %345 = vmatpush1.msra.mxu0 %v313
    %346 = vmatprep.subr.mxu0 0.0
    %347 = vmatpush1.msra.mxu0 0.0
    %348 = vmatprep.subr.mxu0 0.0
    %349 = vmatpush1.msra.mxu0 0.0
    %350 = vmatprep.subr.mxu0 0.0
    %351 = vmatpush1.msra.mxu0 0.0
    %352 = vmatprep.subr.mxu0 0.0
    %353 = vmatpush1.msra.mxu0 0.0
    %354 = vmatprep.subr.mxu0 0.0
    %355 = vmatpush1.msra.mxu0 0.0
    %356 = vmatprep.subr.mxu0 0.0
    %357 = vmatpush1.msra.mxu0 0.0
    %358 = vmatprep.subr.mxu0 0.0
    %359 = vmatpush1.msra.mxu0 0.0
    %360 = vmatprep.subr.mxu0 0.0
    %361 = vmatpush1.msra.mxu0 0.0
    %362 = vmatprep.subr.mxu0 0.0
    %363 = vmatpush1.msra.mxu0 0.0
    %364 = vmatprep.subr.mxu0 0.0
    %365 = vmatpush1.msra.mxu0 0.0
    %366 = vmatprep.subr.mxu0 0.0
    %367 = vmatpush1.msra.mxu0 0.0
    %368 = vmatprep.subr.mxu0 0.0
    %369 = vmatpush1.msra.mxu0 0.0
    %370 = vmatprep.subr.mxu0 0.0
    %371 = vmatpush1.msra.mxu0 0.0
    %372 = vmatprep.subr.mxu0 0.0
    %373 = vmatpush1.msra.mxu0 0.0
    %374 = vmatprep.subr.mxu0 0.0
    %375 = vmatpush1.msra.mxu0 0.0
    %376 = vmatprep.subr.mxu0 0.0
    %377 = vmatpush1.msra.mxu0 0.0
    %378 = vmatprep.mubr.f32.mxu0 0.0
    %379 = vmatmul.mubr.f32.gmra.mrb[0].mxu0 %v296
    %v380 = vpop.f32.mrb[0].mxu0
    %v381 = vadd.f32 0.0, %v380
    %v382 = vpop.f32.mrb[0].mxu0
    %383 = vmatprep.mubr.f32.mxu0 0.0
    %384 = vmatmul.mubr.f32.gmra.mrb[0].mxu0 %v297
    %v385 = vpop.f32.mrb[0].mxu0
    %v386 = vadd.f32 0.0, %v385
    %v387 = vpop.f32.mrb[0].mxu0
    %388 = vdwg.mxu0
    %389 = vmax.xlane.f32.xlu0 %v381
    %v390 = vpop.xlane.xlu0 %389
    %391 = vmax.xlane.f32.xlu0 %v386
    %v392 = vpop.xlane.xlu0 %391
    %v393 = vsub.f32 %v381, %v390
    %v394 = vsub.f32 %v386, %v392
    %v395 = vmul.f32 %v393, 1.442695
    %v396 = vpow.pop %v395
    %v397 = vmul.f32 %v394, 1.442695
    %v398 = vpow.pop %v397
    %399 = vadd.xlane.f32.xlu0 %v396
    %v400 = vpop.xlane.xlu0 %399
    %401 = vadd.xlane.f32.xlu0 %v398
    %v402 = vpop.xlane.xlu0 %401
    %v403 = vmul.f32 %v400, 0.03125
    %v404 = vmul.f32 %v402, 0.03125
    %v405 = vmul.f32 %v396, %v279
    %v406 = vmul.f32 %v398, %v284
    %v407 = vld [vmem:[#allocation10] sm:$0xff]
    %v408 = vld [vmem:[#allocation10 + $0x8] sm:$0xff]
    %v409 = vld [vmem:[#allocation10 + $0x10] sm:$0xff]
    %v410 = vld [vmem:[#allocation10 + $0x18] sm:$0xff]
    %v411 = vld [vmem:[#allocation10 + $0x20] sm:$0xff]
    %v412 = vld [vmem:[#allocation10 + $0x28] sm:$0xff]
    %v413 = vld [vmem:[#allocation10 + $0x30] sm:$0xff]
    %v414 = vld [vmem:[#allocation10 + $0x38] sm:$0xff]
    %v415 = vld [vmem:[#allocation10 + $0x40] sm:$0xff]
    %v416 = vld [vmem:[#allocation10 + $0x48] sm:$0xff]
    %v417 = vld [vmem:[#allocation10 + $0x50] sm:$0xff]
    %v418 = vld [vmem:[#allocation10 + $0x58] sm:$0xff]
    %v419 = vld [vmem:[#allocation10 + $0x60] sm:$0xff]
    %v420 = vld [vmem:[#allocation10 + $0x68] sm:$0xff]
    %v421 = vld [vmem:[#allocation10 + $0x70] sm:$0xff]
    %v422 = vld [vmem:[#allocation10 + $0x78] sm:$0xff]
    %423 = vmatprep.subr.mxu0 0.0
    %424 = vmatpush1.msra.mxu0 %v407
    %425 = vmatprep.subr.mxu0 0.0
    %426 = vmatpush1.msra.mxu0 %v408
    %427 = vmatprep.subr.mxu0 0.0
    %428 = vmatpush1.msra.mxu0 %v409
    %429 = vmatprep.subr.mxu0 0.0
    %430 = vmatpush1.msra.mxu0 %v410
    %431 = vmatprep.subr.mxu0 0.0
    %432 = vmatpush1.msra.mxu0 %v411
    %433 = vmatprep.subr.mxu0 0.0
    %434 = vmatpush1.msra.mxu0 %v412
    %435 = vmatprep.subr.mxu0 0.0
    %436 = vmatpush1.msra.mxu0 %v413
    %437 = vmatprep.subr.mxu0 0.0
    %438 = vmatpush1.msra.mxu0 %v414
    %439 = vmatprep.subr.mxu0 0.0
    %440 = vmatpush1.msra.mxu0 %v415
    %441 = vmatprep.subr.mxu0 0.0
    %442 = vmatpush1.msra.mxu0 %v416
    %443 = vmatprep.subr.mxu0 0.0
    %444 = vmatpush1.msra.mxu0 %v417
    %445 = vmatprep.subr.mxu0 0.0
    %446 = vmatpush1.msra.mxu0 %v418
    %447 = vmatprep.subr.mxu0 0.0
    %448 = vmatpush1.msra.mxu0 %v419
    %449 = vmatprep.subr.mxu0 0.0
    %450 = vmatpush1.msra.mxu0 %v420
    %451 = vmatprep.subr.mxu0 0.0
    %452 = vmatpush1.msra.mxu0 %v421
    %453 = vmatprep.subr.mxu0 0.0
    %454 = vmatpush1.msra.mxu0 %v422
    %455 = vmatprep.subr.mxu0 0.0
    %456 = vmatpush1.msra.mxu0 0.0
    %457 = vmatprep.subr.mxu0 0.0
    %458 = vmatpush1.msra.mxu0 0.0
    %459 = vmatprep.subr.mxu0 0.0
    %460 = vmatpush1.msra.mxu0 0.0
    %461 = vmatprep.subr.mxu0 0.0
    %462 = vmatpush1.msra.mxu0 0.0
    %463 = vmatprep.subr.mxu0 0.0
    %464 = vmatpush1.msra.mxu0 0.0
    %465 = vmatprep.subr.mxu0 0.0
    %466 = vmatpush1.msra.mxu0 0.0
    %467 = vmatprep.subr.mxu0 0.0
    %468 = vmatpush1.msra.mxu0 0.0
    %469 = vmatprep.subr.mxu0 0.0
    %470 = vmatpush1.msra.mxu0 0.0
    %471 = vmatprep.subr.mxu0 0.0
    %472 = vmatpush1.msra.mxu0 0.0
    %473 = vmatprep.subr.mxu0 0.0
    %474 = vmatpush1.msra.mxu0 0.0
    %475 = vmatprep.subr.mxu0 0.0
    %476 = vmatpush1.msra.mxu0 0.0
    %477 = vmatprep.subr.mxu0 0.0
    %478 = vmatpush1.msra.mxu0 0.0
    %479 = vmatprep.subr.mxu0 0.0
    %480 = vmatpush1.msra.mxu0 0.0
    %481 = vmatprep.subr.mxu0 0.0
    %482 = vmatpush1.msra.mxu0 0.0
    %483 = vmatprep.subr.mxu0 0.0
    %484 = vmatpush1.msra.mxu0 0.0
    %485 = vmatprep.subr.mxu0 0.0
    %486 = vmatpush1.msra.mxu0 0.0
    %487 = vmatprep.mubr.f32.mxu0 0.0
    %488 = vmatmul.mubr.f32.gmra.mrb[0].mxu0 %v405
    %v489 = vpop.f32.mrb[0].mxu0
    %v490 = vadd.f32 0.0, %v489
    %v491 = vpop.f32.mrb[0].mxu0
    %492 = vmatprep.mubr.f32.mxu0 0.0
    %493 = vmatmul.mubr.f32.gmra.mrb[0].mxu0 %v406
    %v494 = vpop.f32.mrb[0].mxu0
    %v495 = vadd.f32 0.0, %v494
    %v496 = vpop.f32.mrb[0].mxu0
    %497 = vdwg.mxu0
    %v498 = vrcp.pop %v403
    %v499 = vrcp.pop %v404
    %v500 = vmul.f32 %v490, %v498
    %v501 = vmul.f32 %v495, %v499
    %v502 = vld [vmem:[#allocation11] sm:$0x1]
    %v504 = vlaneseq
    %v505 = vshrl.u32 %v504, 7
    %v506 = vsub.s32 0, %v505
    %v507 = vrot.slane %v502, %v506
    %v509 = vadd.f32 %v500, %v507
    %v510 = vadd.f32 %v501, %v507
    %vm511 = vcmask 261120
    %512 = vst.msk [vmem:[#allocation13] sm:$0xff] %vm511, %v509
    %513 = vst.msk [vmem:[#allocation13 + $0x8] sm:$0xff] %vm511, %v510
    // Predicated region
    $region50: #{tpu_custom_call.1} parent=1 // pred_check
      _
    $region51: #{tpu_custom_call.1} parent=1 // pred_check_branch
      %515 = sbr.rel (0) target = $region53
    $region52: #{tpu_custom_call.1} parent=1 // pred_region
      %s517 = ssub.s32 256, 256
      %518 = vsyncadd [#allocation4], %s517
      %s519 = sshll.u32 [#allocation13], 4
      %s520 = int_to_ptr.vmem [resolvable:$true] %s519
      %525 = dma.vmem_to_hbm [thread:$0]  %s520, 256, %s6, [#allocation4], 128, 128, 8
    $region53: #{tpu_custom_call.1} parent=1 // pred_fallthru
      _
    // Predicated region
    $region54: #{tpu_custom_call.1} parent=1 // pred_check
      _
    $region55: #{tpu_custom_call.1} parent=1 // pred_check_branch
      %527 = sbr.rel (0) target = $region57
    $region56: #{tpu_custom_call.1} parent=1 // pred_region
      %528 = dma.done [#allocation4], 256
    $region57: #{tpu_custom_call.1} parent=1 // pred_fallthru
      _
    %529 = vsyncpa [#allocation3], 1
    %530 = vsyncpa [#allocation6], 1
    %531 = vsyncpa [#allocation9], 1
    %532 = vsyncpa [#allocation12], 1
    %533 = vsyncpa [#allocation4], 1

</llo_original>
